<compile_context>
chip_gen: v6e
topology: v6e:2x2x1
jax: 0.10.0
libtpu: 0.0.40
codegen_flags: <defaults>
</compile_context>

<pallas_src>
import math
from functools import partial

import jax
import jax.numpy as jnp
import numpy as np
from jax.experimental import pallas as pl
from jax.experimental.pallas import tpu as pltpu

_CHUNK = 128      # score-chunk width: multiple of 128 -> lane-dense attn stores
_NEG_BIG = -1e30  # "-inf" stand-in for masked pad positions (avoids inf-inf NaN)


def _x3_attn_kernel(h_ref, ctx_ref, wh_ref, v_ref,
                    out_ref, attn_ref,
                    m_ref, acc_ref,
                    *, seq_len, masked):
    """One (batch-block, seq-tile) grid step.

    h_ref    : (tB, tS, H)  hidden tile (transport dtype, e.g. bf16)
    ctx_ref  : (tB, A)      f32  bh + x0@W0 + x1@W1 + x2@W2 (precomputed)
    wh_ref   : (H, A)       att_Wh (transport dtype)
    v_ref    : (1, A)       f32  att_V
    out_ref  : (tB, H)      output block, resident across the seq axis
    attn_ref : (tB, Sp)     attention probs (padded S), resident across seq;
                            holds RAW (masked) scores until the final seq step
    m_ref    : (tB, 1)      f32 running max
    acc_ref  : (tB, H)      f32 running un-normalized weighted hidden sum
    """
    s = pl.program_id(1)
    tB, tS, H = h_ref.shape
    A = wh_ref.shape[1]
    n_chunks = tS // _CHUNK

    @pl.when(s == 0)
    def _init():
        m_ref[...] = jnp.full(m_ref.shape, _NEG_BIG, dtype=m_ref.dtype)
        acc_ref[...] = jnp.zeros(acc_ref.shape, dtype=acc_ref.dtype)

    # Hoisted out of the chunk loop (JAX does not CSE broadcasts).
    ctx = ctx_ref[...][:, None, :]          # (tB, 1, A) f32
    v = v_ref[...]                          # (1, A)     f32

    # ---- pass 1: raw scores, 128-wide chunks (bounds the (tB,C,A) temp) -----
    def score_chunk(c, carry):
        off = pl.multiple_of(c * _CHUNK, 128)
        hc = h_ref[:, pl.ds(off, _CHUNK), :]                        # (tB, C, H)
        ah = jnp.dot(hc.reshape(tB * _CHUNK, H), wh_ref[...],
                     preferred_element_type=jnp.float32)            # MXU
        w = jnp.maximum(ah.reshape(tB, _CHUNK, A) + ctx, 0.0)       # f32 VPU
        sc = jnp.sum(w * v, axis=-1)                                # (tB, C) f32
        if masked:
            gpos = (s * tS + off
                    + jax.lax.broadcasted_iota(jnp.int32, (tB, _CHUNK), 1))
            sc = jnp.where(gpos < seq_len, sc, _NEG_BIG)
        attn_ref[:, pl.ds(pl.multiple_of(s * tS + off, 128), _CHUNK)] = sc
        return carry

    jax.lax.fori_loop(0, n_chunks, score_chunk, 0)

    # ---- online softmax state + MXU-weighted hidden sum for this tile -------
    scores = attn_ref[:, pl.ds(pl.multiple_of(s * tS, 128), tS)]    # (tB, tS)
    m_old = m_ref[...]
    m_new = jnp.maximum(m_old, jnp.max(scores, axis=-1, keepdims=True))
    alpha = jnp.exp(m_old - m_new)                                  # (tB, 1)
    p = jnp.exp(scores - m_new)                                     # (tB, tS) f32

    # Batched matvec on the MXU (review item 1): (tB,1,tS) @ (tB,tS,H).
    wsum = jnp.einsum("bqs,bsh->bqh",
                      p.astype(h_ref.dtype)[:, None, :], h_ref[...],
                      preferred_element_type=jnp.float32)[:, 0, :]  # (tB, H)
    acc_ref[...] = alpha * acc_ref[...] + wsum
    m_ref[...] = m_new

    @pl.when(s == pl.num_programs(1) - 1)
    def _finalize():
        e = jnp.exp(attn_ref[...] - m_ref[...])                     # (tB, Sp)
        inv_l = pl.reciprocal(jnp.sum(e, axis=-1, keepdims=True), approx=False)
        attn_ref[...] = e * inv_l
        out_ref[...] = (acc_ref[...] * inv_l).astype(out_ref.dtype)


def _round_up(x, m):
    return ((x + m - 1) // m) * m


def _vmem_capacity_bytes():
    try:
        return int(pltpu.get_tpu_info().vmem_capacity_bytes)
    except Exception:
        return 64 * 1024 * 1024   # conservative fallback: v7x per-TC VMEM


def _pick_batch_tile(B):
    # tB == full batch (legal block: equals array dim) when small, else 8
    # (sublane-legal) with B padded to a multiple of 8 -> batch grid >= 2,
    # which feeds both v7x TensorCores for B > 8.
    if B <= 8:
        return B
    return 8


def _pick_seq_tile(S, tB, H, A, h_item, vmem_cap):
    # 128-aligned tiles; bigger target on 128-MiB parts (v5e/v6e), smaller on
    # v7x's 64 MiB.  Shrink until the double-buffered hidden tile + chunked
    # f32 intermediates fit in ~half the budget.
    target = 512 if vmem_cap >= (96 << 20) else 256
    tS = min(target, _round_up(S, 128))
    while tS > 128:
        hidden_bytes = 2 * tB * tS * H * h_item
        inter_bytes = 3 * tB * _CHUNK * A * 4 + 2 * tB * tS * 4
        if hidden_bytes + inter_bytes <= vmem_cap // 2:
            break
        tS -= 128
    return max(tS, 128)


@partial(jax.jit, static_argnames=("transport_dtype",))
def x3_self_attention(hidden_states, x0, x1, x2, params,
                      transport_dtype=jnp.bfloat16):
    """hidden_states: [B,S,H]; x0:[B,H0]; x1:[B,H1]; x2:[B,H2].
    params: 'wh' [H,A], 'bh' [1,A], 'w0' [H0,A], 'w1' [H1,A], 'w2' [H2,A],
            'v' [1,A]  (weights stored transposed, [in, out]).
    Returns (output [B,H], attention_probs [B,S])."""
    B, S, H = hidden_states.shape
    A = params["wh"].shape[1]
    out_dtype = hidden_states.dtype

    # Hoisted context projection: one (B, H0+H1+H2) @ (., A) XLA matmul + bias.
    x_cat = jnp.concatenate([x0, x1, x2], axis=1)
    w_cat = jnp.concatenate([params["w0"], params["w1"], params["w2"]], axis=0)
    ctx = (x_cat @ w_cat + params["bh"]).astype(jnp.float32)        # (B, A)

    cap = _vmem_capacity_bytes()
    h_item = jnp.dtype(transport_dtype).itemsize
    tB = _pick_batch_tile(B)
    tS = _pick_seq_tile(S, tB, H, A, h_item, cap)
    Bp = _round_up(B, tB)
    Sp = _round_up(S, tS)

    # bf16 transport for the dominant HBM stream; compute stays f32 in-kernel.
    hidden = hidden_states.astype(transport_dtype)
    wh = params["wh"].astype(transport_dtype)
    v = params["v"].astype(jnp.float32)

    if Bp != B or Sp != S:
        hidden = jnp.pad(hidden, ((0, Bp - B), (0, Sp - S), (0, 0)))
    if Bp != B:
        ctx = jnp.pad(ctx, ((0, Bp - B), (0, 0)))

    out_item = jnp.dtype(out_dtype).itemsize
    est = (2 * tB * tS * H * h_item            # hidden tile, double-buffered
           + 2 * tB * A * 4                    # ctx block, double-buffered
           + 2 * H * A * h_item + 2 * A * 4    # Wh / V (double-buffered)
           + 2 * tB * H * out_item             # out block, double-buffered
           + 2 * tB * Sp * 4                   # resident attn block
           + tB * (H + 1) * 4                  # f32 scratch (acc, m)
           + 3 * tB * _CHUNK * A * 4           # chunked ah / w f32 temps
           + 2 * tB * tS * 4                   # scores / p f32 temps
           + tB * _CHUNK * H * 4)              # chunk slice / cast headroom
    # <= 48 MiB on v7x (64 MiB VMEM), <= 96 MiB on v5e/v6e (128 MiB VMEM).
    vmem_limit = int(min(cap * 3 // 4, max(32 << 20, int(est * 1.75))))

    kernel = partial(_x3_attn_kernel, seq_len=S, masked=(Sp != S))

    # TODO(synk): mark the grid-invariant Wh/V specs pipeline_mode=pl.Buffered(1)
    # (and Buffered(3) for hidden on v6e) once single-buffering is verified on
    # the target toolchain; skipped here for compile robustness.
    out, attn = pl.pallas_call(
        kernel,
        grid_spec=pltpu.PrefetchScalarGridSpec(
            num_scalar_prefetch=0,
            grid=(Bp // tB, Sp // tS),
            in_specs=[
                pl.BlockSpec((tB, tS, H), lambda b, s: (b, s, 0)),   # hidden
                pl.BlockSpec((tB, A), lambda b, s: (b, 0)),          # ctx bias
                pl.BlockSpec((H, A), lambda b, s: (0, 0)),           # Wh
                pl.BlockSpec((1, A), lambda b, s: (0, 0)),           # V
            ],
            out_specs=[
                pl.BlockSpec((tB, H), lambda b, s: (b, 0)),          # output
                pl.BlockSpec((tB, Sp), lambda b, s: (b, 0)),         # attn probs
            ],
            scratch_shapes=[
                pltpu.VMEM((tB, 1), jnp.float32),                    # running max
                pltpu.VMEM((tB, H), jnp.float32),                    # running acc
            ],
        ),
        out_shape=[
            jax.ShapeDtypeStruct((Bp, H), out_dtype),
            jax.ShapeDtypeStruct((Bp, Sp), jnp.float32),
        ],
        compiler_params=pltpu.CompilerParams(
            dimension_semantics=("parallel", "arbitrary"),
            vmem_limit_bytes=vmem_limit),
    )(hidden, ctx, wh, v)

    return out[:B], attn[:B, :S]


def init_params(key, hidden_size, x0_hidden_size, x1_hidden_size,
                x2_hidden_size, attention_size):
    """Matches X3SelfAttention.reset_parameters, stored transposed [in, out]."""
    ks = jax.random.split(key, 5)
    wh_bound = math.sqrt(6.0 / (hidden_size + attention_size))
    w0_bound = math.sqrt(6.0 / (x0_hidden_size + attention_size))
    w1_bound = math.sqrt(6.0 / (x1_hidden_size + attention_size))
    w2_bound = math.sqrt(6.0 / (x2_hidden_size + attention_size))
    return {
        "wh": jax.random.uniform(ks[0], (hidden_size, attention_size),
                                 jnp.float32, -wh_bound, wh_bound),
        "bh": jnp.zeros((1, attention_size), jnp.float32),
        "w0": jax.random.uniform(ks[1], (x0_hidden_size, attention_size),
                                 jnp.float32, -w0_bound, w0_bound),
        "w1": jax.random.uniform(ks[2], (x1_hidden_size, attention_size),
                                 jnp.float32, -w1_bound, w1_bound),
        "w2": jax.random.uniform(ks[3], (x2_hidden_size, attention_size),
                                 jnp.float32, -w2_bound, w2_bound),
        "v": 0.1 * jax.random.normal(ks[4], (1, attention_size), jnp.float32),
    }


def reference_forward(hidden_states, x0, x1, x2, params):
    """Pure-JAX reference mirroring the PyTorch forward (lengths=None, p=0)."""
    ah = hidden_states @ params["wh"] + params["bh"]          # [B,S,A]
    a0 = (x0 @ params["w0"])[:, None, :]
    a1 = (x1 @ params["w1"])[:, None, :]
    a2 = (x2 @ params["w2"])[:, None, :]
    w = jax.nn.relu(ah + a0 + a1 + a2)                        # [B,S,A]
    scores = jnp.einsum("bsa,a->bs", w, params["v"][0])       # [B,S]
    attn = jax.nn.softmax(scores, axis=1)                     # [B,S]
    out = jnp.einsum("bs,bsh->bh", attn, hidden_states)       # [B,H]
    return out, attn


if __name__ == "__main__":
    keys = jax.random.split(jax.random.PRNGKey(0), 10)

    # --- case 1: small shapes; f32 transport (tight) and bf16 transport ------
    B, S = 2, 8
    hidden_size, x0h, x1h, x2h, att = 32, 16, 24, 8, 32
    hs = jax.random.normal(keys[0], (B, S, hidden_size), jnp.float32)
    x0 = jax.random.normal(keys[1], (B, x0h), jnp.float32)
    x1 = jax.random.normal(keys[2], (B, x1h), jnp.float32)
    x2 = jax.random.normal(keys[3], (B, x2h), jnp.float32)
    params = init_params(keys[4], hidden_size, x0h, x1h, x2h, att)
    ref_out, ref_attn = reference_forward(hs, x0, x1, x2, params)

    out32, attn32 = x3_self_attention(hs, x0, x1, x2, params,
                                      transport_dtype=jnp.float32)
    jax.block_until_ready((out32, attn32))
    np.testing.assert_allclose(np.asarray(out32), np.asarray(ref_out),
                               rtol=1e-2, atol=1e-2)
    np.testing.assert_allclose(np.asarray(attn32), np.asarray(ref_attn),
                               rtol=1e-2, atol=1e-2)

    outbf, attnbf = x3_self_attention(hs, x0, x1, x2, params)  # bf16 transport
    jax.block_until_ready((outbf, attnbf))
    np.testing.assert_allclose(np.asarray(outbf), np.asarray(ref_out),
                               rtol=5e-2, atol=5e-2)
    np.testing.assert_allclose(np.asarray(attnbf), np.asarray(ref_attn),
                               rtol=5e-2, atol=5e-2)

    # --- case 2: padded batch (B>8) + multi seq-tile online softmax (bf16) ---
    B2, S2 = 11, 600
    hidden2, x0h2, x1h2, x2h2, att2 = 64, 16, 24, 8, 48
    hs2 = jax.random.normal(keys[5], (B2, S2, hidden2), jnp.float32)
    x02 = jax.random.normal(keys[6], (B2, x0h2), jnp.float32)
    x12 = jax.random.normal(keys[7], (B2, x1h2), jnp.float32)
    x22 = jax.random.normal(keys[8], (B2, x2h2), jnp.float32)
    params2 = init_params(keys[9], hidden2, x0h2, x1h2, x2h2, att2)
    ref_out2, ref_attn2 = reference_forward(hs2, x02, x12, x22, params2)

    out2, attn2 = x3_self_attention(hs2, x02, x12, x22, params2)
    jax.block_until_ready((out2, attn2))
    np.testing.assert_allclose(np.asarray(out2), np.asarray(ref_out2),
                               rtol=5e-2, atol=2e-2)
    np.testing.assert_allclose(np.asarray(attn2), np.asarray(ref_attn2),
                               rtol=5e-2, atol=1e-3)
    np.testing.assert_allclose(np.asarray(attn2).sum(-1), np.ones(B2),
                               rtol=1e-3, atol=1e-3)

    # TODO(synk): masked-softmax path for lengths != None is not implemented
    # (the seq-pad mask machinery is in place); dropout (p=0) is the identity.
    print("KERNEL_OK")
</pallas_src>

<mosaic_0001>
module attributes {stable_mosaic.version = 11 : i64} {
  func.func @_x3_attn_kernel(%arg0: i32, %arg1: i32, %arg2: memref<2x128x32xf32, #tpu.memory_space<vmem>>, %arg3: memref<2x32xf32, #tpu.memory_space<vmem>>, %arg4: memref<32x32xf32, #tpu.memory_space<vmem>>, %arg5: memref<1x32xf32, #tpu.memory_space<vmem>>, %arg6: memref<2x32xf32, #tpu.memory_space<vmem>>, %arg7: memref<2x128xf32, #tpu.memory_space<vmem>>, %arg8: memref<2x1xf32, #tpu.memory_space<vmem>>, %arg9: memref<2x32xf32, #tpu.memory_space<vmem>>) attributes {dimension_semantics = [#tpu.dimension_semantics<parallel>, #tpu.dimension_semantics<arbitrary>], iteration_bounds = array<i64: 1, 1>, scalar_prefetch = 0 : i64, scratch_operands = 2 : i64, tpu.core_type = #tpu.core_type<tc>, window_params = [{transform_indices = @transform_0, window_bounds = array<i64: 2, 128, 32>}, {transform_indices = @transform_1, window_bounds = array<i64: 2, 32>}, {pipeline_mode = #tpu.pipeline_mode<synchronous>, transform_indices = @transform_2, window_bounds = array<i64: 32, 32>}, {pipeline_mode = #tpu.pipeline_mode<synchronous>, transform_indices = @transform_3, window_bounds = array<i64: 1, 32>}, {transform_indices = @transform_4, window_bounds = array<i64: 2, 32>}, {transform_indices = @transform_5, window_bounds = array<i64: 2, 128>}]} {
    %c0_i32 = arith.constant 0 : i32
    %0 = arith.cmpi eq, %arg1, %c0_i32 : i32
    %1 = arith.extui %0 : i1 to i32
    %c0_i32_0 = arith.constant 0 : i32
    %2 = arith.cmpi ne, %1, %c0_i32_0 : i32
    scf.if %2 {
      %cst_32 = arith.constant -1.000000e+30 : f32
      %62 = vector.broadcast %cst_32 : f32 to vector<2x1xf32>
      %c0_33 = arith.constant 0 : index
      %c0_34 = arith.constant 0 : index
      %63 = vector.load %arg8[%c0_33, %c0_34] : memref<2x1xf32, #tpu.memory_space<vmem>>, vector<2x1xf32>
      tpu.vector_store %arg8[%c0_33, %c0_34], %62 {strides = array<i32>} : memref<2x1xf32, #tpu.memory_space<vmem>>, vector<2x1xf32>,
      %cst_35 = arith.constant 0.000000e+00 : f32
      %64 = vector.broadcast %cst_35 : f32 to vector<2x32xf32>
      %c0_36 = arith.constant 0 : index
      %c0_37 = arith.constant 0 : index
      %65 = vector.load %arg9[%c0_36, %c0_37] : memref<2x32xf32, #tpu.memory_space<vmem>>, vector<2x32xf32>
      tpu.vector_store %arg9[%c0_36, %c0_37], %64 {strides = array<i32>} : memref<2x32xf32, #tpu.memory_space<vmem>>, vector<2x32xf32>,
    } else {
    }
    %c0 = arith.constant 0 : index
    %c0_1 = arith.constant 0 : index
    %3 = vector.load %arg3[%c0, %c0_1] : memref<2x32xf32, #tpu.memory_space<vmem>>, vector<2x32xf32>
    %4 = vector.shape_cast %3 : vector<2x32xf32> to vector<2x1x32xf32>
    %c0_2 = arith.constant 0 : index
    %c0_3 = arith.constant 0 : index
    %5 = vector.load %arg5[%c0_2, %c0_3] : memref<1x32xf32, #tpu.memory_space<vmem>>, vector<1x32xf32>
    %c0_i32_4 = arith.constant 0 : i32
    %c128_i32 = arith.constant 128 : i32
    %6 = arith.muli %c0_i32_4, %c128_i32 : i32
    %7 = tpu.assume_multiple %6, 128 : i32
    %c0_5 = arith.constant 0 : index
    %8 = arith.index_cast %7 : i32 to index
    %c0_6 = arith.constant 0 : index
    %9 = vector.load %arg2[%c0_5, %8, %c0_6] : memref<2x128x32xf32, #tpu.memory_space<vmem>>, vector<2x128x32xf32>
    %10 = vector.shape_cast %9 : vector<2x128x32xf32> to vector<256x32xf32>
    %c0_7 = arith.constant 0 : index
    %c0_8 = arith.constant 0 : index
    %11 = vector.load %arg4[%c0_7, %c0_8] : memref<32x32xf32, #tpu.memory_space<vmem>>, vector<32x32xf32>
    %cst = arith.constant dense<0.000000e+00> : vector<256x32xf32>
    %12 = tpu.matmul %10, %11, %cst {dimension_numbers = #tpu.dot_dimension_numbers<[1], [0], [0], [1], [0, 0, 1, 1], [], []>} : vector<256x32xf32>, vector<32x32xf32>, vector<256x32xf32> -> vector<256x32xf32>
    %13 = vector.shape_cast %12 : vector<256x32xf32> to vector<2x128x32xf32>
    %14 = vector.broadcast %4 : vector<2x1x32xf32> to vector<2x128x32xf32>
    %15 = arith.addf %13, %14 : vector<2x128x32xf32>
    %cst_9 = arith.constant 0.000000e+00 : f32
    %16 = vector.broadcast %cst_9 : f32 to vector<2x128x32xf32>
    %17 = arith.maximumf %15, %16 : vector<2x128x32xf32>
    %18 = vector.shape_cast %5 : vector<1x32xf32> to vector<1x1x32xf32>
    %19 = vector.broadcast %18 : vector<1x1x32xf32> to vector<2x128x32xf32>
    %20 = arith.mulf %17, %19 : vector<2x128x32xf32>
    %cst_10 = arith.constant dense<0.000000e+00> : vector<2x128xf32>
    %21 = vector.multi_reduction <add>, %20, %cst_10 [2] : vector<2x128x32xf32> to vector<2x128xf32>
    %c128_i32_11 = arith.constant 128 : i32
    %22 = arith.muli %arg1, %c128_i32_11 : i32
    %23 = arith.addi %22, %7 : i32
    %24 = tpu.iota {dimensions = array<i32: 1>} : vector<2x128xi32>
    %25 = vector.broadcast %23 : i32 to vector<2x128xi32>
    %26 = arith.addi %25, %24 : vector<2x128xi32>
    %c8_i32 = arith.constant 8 : i32
    %27 = vector.broadcast %c8_i32 : i32 to vector<2x128xi32>
    %28 = arith.cmpi slt, %26, %27 : vector<2x128xi32>
    %cst_12 = arith.constant -1.000000e+30 : f32
    %29 = vector.broadcast %cst_12 : f32 to vector<2x128xf32>
    %30 = arith.select %28, %21, %29 : vector<2x128xi1>, vector<2x128xf32>
    %c128_i32_13 = arith.constant 128 : i32
    %31 = arith.muli %arg1, %c128_i32_13 : i32
    %32 = arith.addi %31, %7 : i32
    %33 = tpu.assume_multiple %32, 128 : i32
    %c0_14 = arith.constant 0 : index
    %34 = arith.index_cast %33 : i32 to index
    %35 = vector.load %arg7[%c0_14, %34] : memref<2x128xf32, #tpu.memory_space<vmem>>, vector<2x128xf32>
    tpu.vector_store %arg7[%c0_14, %34], %30 {strides = array<i32>} : memref<2x128xf32, #tpu.memory_space<vmem>>, vector<2x128xf32>,
    %c1_i32 = arith.constant 1 : i32
    %c128_i32_15 = arith.constant 128 : i32
    %36 = arith.muli %arg1, %c128_i32_15 : i32
    %37 = tpu.assume_multiple %36, 128 : i32
    %c0_16 = arith.constant 0 : index
    %38 = arith.index_cast %37 : i32 to index
    %39 = vector.load %arg7[%c0_16, %38] : memref<2x128xf32, #tpu.memory_space<vmem>>, vector<2x128xf32>
    %c0_17 = arith.constant 0 : index
    %c0_18 = arith.constant 0 : index
    %40 = vector.load %arg8[%c0_17, %c0_18] : memref<2x1xf32, #tpu.memory_space<vmem>>, vector<2x1xf32>
    %cst_19 = arith.constant dense<0xFF800000> : vector<2xf32>
    %41 = vector.multi_reduction <maximumf>, %39, %cst_19 [1] : vector<2x128xf32> to vector<2xf32>
    %42 = vector.shape_cast %41 : vector<2xf32> to vector<2x1xf32>
    %43 = arith.maximumf %40, %42 : vector<2x1xf32>
    %44 = arith.subf %40, %43 : vector<2x1xf32>
    %45 = math.exp %44 : vector<2x1xf32>
    %46 = vector.broadcast %43 : vector<2x1xf32> to vector<2x128xf32>
    %47 = arith.subf %39, %46 : vector<2x128xf32>
    %48 = math.exp %47 : vector<2x128xf32>
    %49 = vector.shape_cast %48 : vector<2x128xf32> to vector<2x1x128xf32>
    %c0_20 = arith.constant 0 : index
    %c0_21 = arith.constant 0 : index
    %c0_22 = arith.constant 0 : index
    %50 = vector.load %arg2[%c0_20, %c0_21, %c0_22] : memref<2x128x32xf32, #tpu.memory_space<vmem>>, vector<2x128x32xf32>
    "tpu.trace_start"() <{level = 10 : i32, message = "bqs,bsh->bqh"}> : () -> ()
    %cst_23 = arith.constant dense<0.000000e+00> : vector<2x1x32xf32>
    %51 = tpu.matmul %49, %50, %cst_23 {dimension_numbers = #tpu.dot_dimension_numbers<[2], [1], [1], [2], [0, 0, 0, 1, 1, 2], [0], [0]>} : vector<2x1x128xf32>, vector<2x128x32xf32>, vector<2x1x32xf32> -> vector<2x1x32xf32>
    "tpu.trace_stop"() : () -> ()
    %52 = vector.shape_cast %51 : vector<2x1x32xf32> to vector<2x32xf32>
    %c0_24 = arith.constant 0 : index
    %c0_25 = arith.constant 0 : index
    %53 = vector.load %arg9[%c0_24, %c0_25] : memref<2x32xf32, #tpu.memory_space<vmem>>, vector<2x32xf32>
    %54 = vector.broadcast %45 : vector<2x1xf32> to vector<2x32xf32>
    %55 = arith.mulf %54, %53 : vector<2x32xf32>
    %56 = arith.addf %55, %52 : vector<2x32xf32>
    %c0_26 = arith.constant 0 : index
    %c0_27 = arith.constant 0 : index
    %57 = vector.load %arg9[%c0_26, %c0_27] : memref<2x32xf32, #tpu.memory_space<vmem>>, vector<2x32xf32>
    tpu.vector_store %arg9[%c0_26, %c0_27], %56 {strides = array<i32>} : memref<2x32xf32, #tpu.memory_space<vmem>>, vector<2x32xf32>,
    %c0_28 = arith.constant 0 : index
    %c0_29 = arith.constant 0 : index
    %58 = vector.load %arg8[%c0_28, %c0_29] : memref<2x1xf32, #tpu.memory_space<vmem>>, vector<2x1xf32>
    tpu.vector_store %arg8[%c0_28, %c0_29], %43 {strides = array<i32>} : memref<2x1xf32, #tpu.memory_space<vmem>>, vector<2x1xf32>,
    %c0_i32_30 = arith.constant 0 : i32
    %59 = arith.cmpi eq, %arg1, %c0_i32_30 : i32
    %60 = arith.extui %59 : i1 to i32
    %c0_i32_31 = arith.constant 0 : i32
    %61 = arith.cmpi ne, %60, %c0_i32_31 : i32
    scf.if %61 {
      %c0_32 = arith.constant 0 : index
      %c0_33 = arith.constant 0 : index
      %62 = vector.load %arg7[%c0_32, %c0_33] : memref<2x128xf32, #tpu.memory_space<vmem>>, vector<2x128xf32>
      %c0_34 = arith.constant 0 : index
      %c0_35 = arith.constant 0 : index
      %63 = vector.load %arg8[%c0_34, %c0_35] : memref<2x1xf32, #tpu.memory_space<vmem>>, vector<2x1xf32>
      %64 = vector.broadcast %63 : vector<2x1xf32> to vector<2x128xf32>
      %65 = arith.subf %62, %64 : vector<2x128xf32>
      %66 = math.exp %65 : vector<2x128xf32>
      %cst_36 = arith.constant dense<0.000000e+00> : vector<2xf32>
      %67 = vector.multi_reduction <add>, %66, %cst_36 [1] : vector<2x128xf32> to vector<2xf32>
      %68 = vector.shape_cast %67 : vector<2xf32> to vector<2x1xf32>
      %69 = tpu.reciprocal %68 : vector<2x1xf32> -> vector<2x1xf32>
      %70 = vector.broadcast %69 : vector<2x1xf32> to vector<2x128xf32>
      %71 = arith.mulf %66, %70 : vector<2x128xf32>
      %c0_37 = arith.constant 0 : index
      %c0_38 = arith.constant 0 : index
      %72 = vector.load %arg7[%c0_37, %c0_38] : memref<2x128xf32, #tpu.memory_space<vmem>>, vector<2x128xf32>
      tpu.vector_store %arg7[%c0_37, %c0_38], %71 {strides = array<i32>} : memref<2x128xf32, #tpu.memory_space<vmem>>, vector<2x128xf32>,
      %c0_39 = arith.constant 0 : index
      %c0_40 = arith.constant 0 : index
      %73 = vector.load %arg9[%c0_39, %c0_40] : memref<2x32xf32, #tpu.memory_space<vmem>>, vector<2x32xf32>
      %74 = vector.broadcast %69 : vector<2x1xf32> to vector<2x32xf32>
      %75 = arith.mulf %73, %74 : vector<2x32xf32>
      %c0_41 = arith.constant 0 : index
      %c0_42 = arith.constant 0 : index
      %76 = vector.load %arg6[%c0_41, %c0_42] : memref<2x32xf32, #tpu.memory_space<vmem>>, vector<2x32xf32>
      tpu.vector_store %arg6[%c0_41, %c0_42], %75 {strides = array<i32>} : memref<2x32xf32, #tpu.memory_space<vmem>>, vector<2x32xf32>,
    } else {
    }
    return
  }
  func.func @transform_0(%arg0: i32, %arg1: i32) -> (i32, i32, i32) {
    %c0_i32 = arith.constant 0 : i32
    %c0_i32_0 = arith.constant 0 : i32
    return %arg0, %arg1, %c0_i32 : i32, i32, i32
  }
  func.func @transform_1(%arg0: i32, %arg1: i32) -> (i32, i32) {
    %c0_i32 = arith.constant 0 : i32
    %c0_i32_0 = arith.constant 0 : i32
    return %arg0, %c0_i32 : i32, i32
  }
  func.func @transform_2(%arg0: i32, %arg1: i32) -> (i32, i32) {
    %c0_i32 = arith.constant 0 : i32
    %c0_i32_0 = arith.constant 0 : i32
    %c0_i32_1 = arith.constant 0 : i32
    return %c0_i32, %c0_i32_0 : i32, i32
  }
  func.func @transform_3(%arg0: i32, %arg1: i32) -> (i32, i32) {
    %c0_i32 = arith.constant 0 : i32
    %c0_i32_0 = arith.constant 0 : i32
    %c0_i32_1 = arith.constant 0 : i32
    return %c0_i32, %c0_i32_0 : i32, i32
  }
  func.func @transform_4(%arg0: i32, %arg1: i32) -> (i32, i32) {
    %c0_i32 = arith.constant 0 : i32
    %c0_i32_0 = arith.constant 0 : i32
    return %arg0, %c0_i32 : i32, i32
  }
  func.func @transform_5(%arg0: i32, %arg1: i32) -> (i32, i32) {
    %c0_i32 = arith.constant 0 : i32
    %c0_i32_0 = arith.constant 0 : i32
    return %arg0, %c0_i32 : i32, i32
  }
}

</mosaic_0001>

<llo_original>
// kernel: x3_self_attention.1
$region0: #{x3_self_attention.1}
  #allocation0 [shape = 'u32[]', space=smem, size = 0x4, offset = 0x4, fixed_abs, tag = 'smem constant byte address 0x4 - core index']
  #allocation1 [shape = 'u32[144,128]{1,0:T(1,128)}', space=vmem, size = 0x12000, scoped, tag = 'internal scratch']
  #allocation2 [shape = 'f32[2,1]{1,0:T(2,128)}', space=vmem, size = 0x400, scoped, tag = 'scratch operand']
  #allocation3 [shape = 'f32[2,32]{1,0:T(2,128)}', space=vmem, size = 0x400, scoped, tag = 'scratch operand']
  %s0 = inlined_call_operand.vmem [shape: f32[2,128,32], index: 0, kind: input, shape index: {}]
  %s1 = inlined_call_operand.vmem [shape: f32[2,32], index: 1, kind: input, shape index: {}]
  %s2 = inlined_call_operand.vmem [shape: f32[32,32], index: 2, kind: input, shape index: {}]
  %s3 = inlined_call_operand.vmem [shape: f32[1,32], index: 3, kind: input, shape index: {}]
  %s4 = inlined_call_operand.hbm [shape: f32[2,32], index: 4, kind: output, shape index: {0}]
  %s5 = inlined_call_operand.hbm [shape: f32[2,128], index: 5, kind: output, shape index: {1}]
  %6 = xla_tuple %s4, %s5
  %s7 = sld [smem:[#allocation0]]
  $region42: #{x3_self_attention.1} parent=0
    _
  %s9 = ssub.s32 1, %s7
  %s10 = scalar_select 0, %s9, %s7
  $region1: #{x3_self_attention.1} parent=0
    #allocation4 [shape = 'u8[1024]{0}', space=vmem, size = 0x400, scoped, tag = 'output window, operand 0, single buffered']
    #allocation5 [shape = 's32[1]{0}', space=sflag, size = 0x4, scoped, tag = 'scoped memory for x3_self_attention.1']
    #allocation6 [shape = 'u8[1024]{0}', space=vmem, size = 0x400, scoped, tag = 'output window, operand 1, single buffered']
    #allocation7 [shape = 's32[1]{0}', space=sflag, size = 0x4, scoped, tag = 'scoped memory for x3_self_attention.1']
    %11 = vsyncpa [#allocation5], 0
    %12 = vsyncpa [#allocation7], 0
    // Predicated region
    $region2: #{x3_self_attention.1} parent=1 // pred_check
      _
    $region3: #{x3_self_attention.1} parent=1 // pred_check_branch
      %14 = sbr.rel (0) target = $region5
    $region4: #{x3_self_attention.1} parent=1 // pred_region
      _
    $region5: #{x3_self_attention.1} parent=1 // pred_fallthru
      _
    // Predicated region
    $region6: #{x3_self_attention.1} parent=1 // pred_check
      _
    $region7: #{x3_self_attention.1} parent=1 // pred_check_branch
      %16 = sbr.rel (0) target = $region9
    $region8: #{x3_self_attention.1} parent=1 // pred_region
      _
    $region9: #{x3_self_attention.1} parent=1 // pred_fallthru
      _
    // Predicated region
    $region10: #{x3_self_attention.1} parent=1 // pred_check
      _
    $region11: #{x3_self_attention.1} parent=1 // pred_check_branch
      %18 = sbr.rel (0) target = $region13
    $region12: #{x3_self_attention.1} parent=1 // pred_region
      _
    $region13: #{x3_self_attention.1} parent=1 // pred_fallthru
      _
    // Predicated region
    $region14: #{x3_self_attention.1} parent=1 // pred_check
      _
    $region15: #{x3_self_attention.1} parent=1 // pred_check_branch
      %20 = sbr.rel (0) target = $region17
    $region16: #{x3_self_attention.1} parent=1 // pred_region
      _
    $region17: #{x3_self_attention.1} parent=1 // pred_fallthru
      _
    %p21 = scmp.eq.s32.totalorder 0, 0
    // Predicated region
    $region18: #{x3_self_attention.1} parent=1 // pred_check
      %p22 = pneg %p21
    $region19: #{x3_self_attention.1} parent=1 // pred_check_branch
      %24 = sbr.rel (%p22) target = $region21
    $region20: #{x3_self_attention.1} parent=1 // pred_region
      %vm25 = vcmask 1024
      %26 = vst.msk [vmem:[#allocation2] sm:$0x3] %vm25, -1e+30
      %vm27 = vcmask 254976
      %28 = vst.msk [vmem:[#allocation3] sm:$0x3] %vm27, 0.0
    $region21: #{x3_self_attention.1} parent=1 // pred_fallthru
      _
    %v29 = vld [vmem:[%s1] sm:$0x3]
    %v32 = vunpack.c.l.s4 1966171168
    %v33 = vunpack.c.0.s8 %v32
    %v34 = vlaneseq
    %v35 = vshrl.u32 %v34, 7
    %v36 = vsub.s32 %v33, %v35
    %v37 = vrot.slane %v29, %v36
    %v38 = vcombine.high %v37, %v37
    %v40 = vunpack.c.l.s4 1966171168
    %v41 = vunpack.c.0.s8 %v40
    %v42 = vlaneseq
    %v43 = vshrl.u32 %v42, 7
    %v44 = vsub.s32 %v41, %v43
    %v45 = vrot.slane %v37, %v44
    %v47 = vunpack.c.l.s4 1966171168
    %v48 = vunpack.c.0.s8 %v47
    %v49 = vlaneseq
    %v50 = vshrl.u32 %v49, 7
    %v51 = vsub.s32 %v48, %v50
    %v52 = vrot.slane %v38, %v51
    %v53 = vld [vmem:[%s3] sm:$0x1]
    %v54 = vld [vmem:[%s0] sm:$0xff]
    %v55 = vld [vmem:[%s0 + $0x8] sm:$0xff]
    %v56 = vld [vmem:[%s0 + $0x10] sm:$0xff]
    %v57 = vld [vmem:[%s0 + $0x18] sm:$0xff]
    %v58 = vld [vmem:[%s0 + $0x20] sm:$0xff]
    %v59 = vld [vmem:[%s0 + $0x28] sm:$0xff]
    %v60 = vld [vmem:[%s0 + $0x30] sm:$0xff]
    %v61 = vld [vmem:[%s0 + $0x38] sm:$0xff]
    %v62 = vld [vmem:[%s0 + $0x40] sm:$0xff]
    %v63 = vld [vmem:[%s0 + $0x48] sm:$0xff]
    %v64 = vld [vmem:[%s0 + $0x50] sm:$0xff]
    %v65 = vld [vmem:[%s0 + $0x58] sm:$0xff]
    %v66 = vld [vmem:[%s0 + $0x60] sm:$0xff]
    %v67 = vld [vmem:[%s0 + $0x68] sm:$0xff]
    %v68 = vld [vmem:[%s0 + $0x70] sm:$0xff]
    %v69 = vld [vmem:[%s0 + $0x78] sm:$0xff]
    %v70 = vld [vmem:[%s0 + $0x80] sm:$0xff]
    %v71 = vld [vmem:[%s0 + $0x88] sm:$0xff]
    %v72 = vld [vmem:[%s0 + $0x90] sm:$0xff]
    %v73 = vld [vmem:[%s0 + $0x98] sm:$0xff]
    %v74 = vld [vmem:[%s0 + $0xa0] sm:$0xff]
    %v75 = vld [vmem:[%s0 + $0xa8] sm:$0xff]
    %v76 = vld [vmem:[%s0 + $0xb0] sm:$0xff]
    %v77 = vld [vmem:[%s0 + $0xb8] sm:$0xff]
    %v78 = vld [vmem:[%s0 + $0xc0] sm:$0xff]
    %v79 = vld [vmem:[%s0 + $0xc8] sm:$0xff]
    %v80 = vld [vmem:[%s0 + $0xd0] sm:$0xff]
    %v81 = vld [vmem:[%s0 + $0xd8] sm:$0xff]
    %v82 = vld [vmem:[%s0 + $0xe0] sm:$0xff]
    %v83 = vld [vmem:[%s0 + $0xe8] sm:$0xff]
    %v84 = vld [vmem:[%s0 + $0xf0] sm:$0xff]
    %v85 = vld [vmem:[%s0 + $0xf8] sm:$0xff]
    %v86 = vld [vmem:[%s2] sm:$0xff]
    %v87 = vld [vmem:[%s2 + $0x8] sm:$0xff]
    %v88 = vld [vmem:[%s2 + $0x10] sm:$0xff]
    %v89 = vld [vmem:[%s2 + $0x18] sm:$0xff]
    %vm90 = vcmask 261120
    %v92 = vsel %vm90, %v54, 0
    %v95 = vsel %vm90, %v55, 0
    %v98 = vsel %vm90, %v56, 0
    %v101 = vsel %vm90, %v57, 0
    %v104 = vsel %vm90, %v58, 0
    %v107 = vsel %vm90, %v59, 0
    %v110 = vsel %vm90, %v60, 0
    %v113 = vsel %vm90, %v61, 0
    %v116 = vsel %vm90, %v62, 0
    %v119 = vsel %vm90, %v63, 0
    %v122 = vsel %vm90, %v64, 0
    %v125 = vsel %vm90, %v65, 0
    %v128 = vsel %vm90, %v66, 0
    %v131 = vsel %vm90, %v67, 0
    %v134 = vsel %vm90, %v68, 0
    %v137 = vsel %vm90, %v69, 0
    %v140 = vsel %vm90, %v70, 0
    %v143 = vsel %vm90, %v71, 0
    %v146 = vsel %vm90, %v72, 0
    %v149 = vsel %vm90, %v73, 0
    %v152 = vsel %vm90, %v74, 0
    %v155 = vsel %vm90, %v75, 0
    %v158 = vsel %vm90, %v76, 0
    %v161 = vsel %vm90, %v77, 0
    %v164 = vsel %vm90, %v78, 0
    %v167 = vsel %vm90, %v79, 0
    %v170 = vsel %vm90, %v80, 0
    %v173 = vsel %vm90, %v81, 0
    %v176 = vsel %vm90, %v82, 0
    %v179 = vsel %vm90, %v83, 0
    %v182 = vsel %vm90, %v84, 0
    %v185 = vsel %vm90, %v85, 0
    %187 = vmatprep.subr.mxu0 0.0
    %188 = vmatpush1.msra.mxu0 0.0
    %189 = vmatprep.subr.mxu0 0.0
    %190 = vmatpush1.msra.mxu0 0.0
    %191 = vmatprep.subr.mxu0 0.0
    %192 = vmatpush1.msra.mxu0 0.0
    %193 = vmatprep.subr.mxu0 0.0
    %194 = vmatpush1.msra.mxu0 0.0
    %195 = vmatprep.subr.mxu0 0.0
    %196 = vmatpush1.msra.mxu0 0.0
    %197 = vmatprep.subr.mxu0 0.0
    %198 = vmatpush1.msra.mxu0 0.0
    %199 = vmatprep.subr.mxu0 0.0
    %200 = vmatpush1.msra.mxu0 0.0
    %201 = vmatprep.subr.mxu0 0.0
    %202 = vmatpush1.msra.mxu0 0.0
    %203 = vmatprep.subr.mxu0 0.0
    %204 = vmatpush1.msra.mxu0 0.0
    %205 = vmatprep.subr.mxu0 0.0
    %206 = vmatpush1.msra.mxu0 0.0
    %207 = vmatprep.subr.mxu0 0.0
    %208 = vmatpush1.msra.mxu0 0.0
    %209 = vmatprep.subr.mxu0 0.0
    %210 = vmatpush1.msra.mxu0 0.0
    %211 = vmatprep.subr.mxu0 0.0
    %212 = vmatpush1.msra.mxu0 %v89
    %213 = vmatprep.subr.mxu0 0.0
    %214 = vmatpush1.msra.mxu0 %v88
    %215 = vmatprep.subr.mxu0 0.0
    %216 = vmatpush1.msra.mxu0 %v87
    %217 = vmatprep.subr.mxu0 0.0
    %218 = vmatpush1.msra.mxu0 %v86
    %219 = vmatprep.subr.mxu0 0.0
    %220 = vmatpush2.msra.mxu0 0.0
    %221 = vmatprep.subr.mxu0 0.0
    %222 = vmatpush2.msra.mxu0 0.0
    %223 = vmatprep.subr.mxu0 0.0
    %224 = vmatpush2.msra.mxu0 0.0
    %225 = vmatprep.subr.mxu0 0.0
    %226 = vmatpush2.msra.mxu0 0.0
    %227 = vmatprep.subr.mxu0 0.0
    %228 = vmatpush2.msra.mxu0 0.0
    %229 = vmatprep.subr.mxu0 0.0
    %230 = vmatpush2.msra.mxu0 0.0
    %231 = vmatprep.subr.mxu0 0.0
    %232 = vmatpush2.msra.mxu0 0.0
    %233 = vmatprep.subr.mxu0 0.0
    %234 = vmatpush2.msra.mxu0 0.0
    %235 = vmatprep.subr.mxu0 0.0
    %236 = vmatpush2.msra.mxu0 0.0
    %237 = vmatprep.subr.mxu0 0.0
    %238 = vmatpush2.msra.mxu0 0.0
    %239 = vmatprep.subr.mxu0 0.0
    %240 = vmatpush2.msra.mxu0 0.0
    %241 = vmatprep.subr.mxu0 0.0
    %242 = vmatpush2.msra.mxu0 0.0
    %243 = vmatprep.subr.mxu0 0.0
    %244 = vmatpush2.msra.mxu0 0.0
    %245 = vmatprep.subr.mxu0 0.0
    %246 = vmatpush2.msra.mxu0 0.0
    %247 = vmatprep.subr.mxu0 0.0
    %248 = vmatpush2.msra.mxu0 0.0
    %249 = vmatprep.subr.mxu0 0.0
    %250 = vmatpush2.msra.mxu0 0.0
    %251 = vmatprep.mubr.f32.mxu0 0.0
    %252 = vmatmul.mubr.f32.gmra.mxu0 %v92
    %v253 = vpop.f32.mrf.mxu0
    %v254 = vadd.f32 0.0, %v253
    %v255 = vpop.f32.mrf.mxu0
    %256 = vmatprep.mubr.f32.mxu0 0.0
    %257 = vmatmul.mubr.f32.gmra.mxu0 %v95
    %v258 = vpop.f32.mrf.mxu0
    %v259 = vadd.f32 0.0, %v258
    %v260 = vpop.f32.mrf.mxu0
    %261 = vmatprep.mubr.f32.mxu0 0.0
    %262 = vmatmul.mubr.f32.gmra.mxu0 %v98
    %v263 = vpop.f32.mrf.mxu0
    %v264 = vadd.f32 0.0, %v263
    %v265 = vpop.f32.mrf.mxu0
    %266 = vmatprep.mubr.f32.mxu0 0.0
    %267 = vmatmul.mubr.f32.gmra.mxu0 %v101
    %v268 = vpop.f32.mrf.mxu0
    %v269 = vadd.f32 0.0, %v268
    %v270 = vpop.f32.mrf.mxu0
    %271 = vmatprep.mubr.f32.mxu0 0.0
    %272 = vmatmul.mubr.f32.gmra.mxu0 %v104
    %v273 = vpop.f32.mrf.mxu0
    %v274 = vadd.f32 0.0, %v273
    %v275 = vpop.f32.mrf.mxu0
    %276 = vmatprep.mubr.f32.mxu0 0.0
    %277 = vmatmul.mubr.f32.gmra.mxu0 %v107
    %v278 = vpop.f32.mrf.mxu0
    %v279 = vadd.f32 0.0, %v278
    %v280 = vpop.f32.mrf.mxu0
    %281 = vmatprep.mubr.f32.mxu0 0.0
    %282 = vmatmul.mubr.f32.gmra.mxu0 %v110
    %v283 = vpop.f32.mrf.mxu0
    %v284 = vadd.f32 0.0, %v283
    %v285 = vpop.f32.mrf.mxu0
    %286 = vmatprep.mubr.f32.mxu0 0.0
    %287 = vmatmul.mubr.f32.gmra.mxu0 %v113
    %v288 = vpop.f32.mrf.mxu0
    %v289 = vadd.f32 0.0, %v288
    %v290 = vpop.f32.mrf.mxu0
    %291 = vmatprep.mubr.f32.mxu0 0.0
    %292 = vmatmul.mubr.f32.gmra.mxu0 %v116
    %v293 = vpop.f32.mrf.mxu0
    %v294 = vadd.f32 0.0, %v293
    %v295 = vpop.f32.mrf.mxu0
    %296 = vmatprep.mubr.f32.mxu0 0.0
    %297 = vmatmul.mubr.f32.gmra.mxu0 %v119
    %v298 = vpop.f32.mrf.mxu0
    %v299 = vadd.f32 0.0, %v298
    %v300 = vpop.f32.mrf.mxu0
    %301 = vmatprep.mubr.f32.mxu0 0.0
    %302 = vmatmul.mubr.f32.gmra.mxu0 %v122
    %v303 = vpop.f32.mrf.mxu0
    %v304 = vadd.f32 0.0, %v303
    %v305 = vpop.f32.mrf.mxu0
    %306 = vmatprep.mubr.f32.mxu0 0.0
    %307 = vmatmul.mubr.f32.gmra.mxu0 %v125
    %v308 = vpop.f32.mrf.mxu0
    %v309 = vadd.f32 0.0, %v308
    %v310 = vpop.f32.mrf.mxu0
    %311 = vmatprep.mubr.f32.mxu0 0.0
    %312 = vmatmul.mubr.f32.gmra.mxu0 %v128
    %v313 = vpop.f32.mrf.mxu0
    %v314 = vadd.f32 0.0, %v313
    %v315 = vpop.f32.mrf.mxu0
    %316 = vmatprep.mubr.f32.mxu0 0.0
    %317 = vmatmul.mubr.f32.gmra.mxu0 %v131
    %v318 = vpop.f32.mrf.mxu0
    %v319 = vadd.f32 0.0, %v318
    %v320 = vpop.f32.mrf.mxu0
    %321 = vmatprep.mubr.f32.mxu0 0.0
    %322 = vmatmul.mubr.f32.gmra.mxu0 %v134
    %v323 = vpop.f32.mrf.mxu0
    %v324 = vadd.f32 0.0, %v323
    %v325 = vpop.f32.mrf.mxu0
    %326 = vmatprep.mubr.f32.mxu0 0.0
    %327 = vmatmul.mubr.f32.gmra.mxu0 %v137
    %v328 = vpop.f32.mrf.mxu0
    %v329 = vadd.f32 0.0, %v328
    %v330 = vpop.f32.mrf.mxu0
    %331 = vmatprep.mubr.f32.mxu0 0.0
    %332 = vmatmul.mubr.f32.gmra.mxu0 %v140
    %v333 = vpop.f32.mrf.mxu0
    %v334 = vadd.f32 0.0, %v333
    %v335 = vpop.f32.mrf.mxu0
    %336 = vmatprep.mubr.f32.mxu0 0.0
    %337 = vmatmul.mubr.f32.gmra.mxu0 %v143
    %v338 = vpop.f32.mrf.mxu0
    %v339 = vadd.f32 0.0, %v338
    %v340 = vpop.f32.mrf.mxu0
    %341 = vmatprep.mubr.f32.mxu0 0.0
    %342 = vmatmul.mubr.f32.gmra.mxu0 %v146
    %v343 = vpop.f32.mrf.mxu0
    %v344 = vadd.f32 0.0, %v343
    %v345 = vpop.f32.mrf.mxu0
    %346 = vmatprep.mubr.f32.mxu0 0.0
    %347 = vmatmul.mubr.f32.gmra.mxu0 %v149
    %v348 = vpop.f32.mrf.mxu0
    %v349 = vadd.f32 0.0, %v348
    %v350 = vpop.f32.mrf.mxu0
    %351 = vmatprep.mubr.f32.mxu0 0.0
    %352 = vmatmul.mubr.f32.gmra.mxu0 %v152
    %v353 = vpop.f32.mrf.mxu0
    %v354 = vadd.f32 0.0, %v353
    %v355 = vpop.f32.mrf.mxu0
    %356 = vmatprep.mubr.f32.mxu0 0.0
    %357 = vmatmul.mubr.f32.gmra.mxu0 %v155
    %v358 = vpop.f32.mrf.mxu0
    %v359 = vadd.f32 0.0, %v358
    %v360 = vpop.f32.mrf.mxu0
    %361 = vmatprep.mubr.f32.mxu0 0.0
    %362 = vmatmul.mubr.f32.gmra.mxu0 %v158
    %v363 = vpop.f32.mrf.mxu0
    %v364 = vadd.f32 0.0, %v363
    %v365 = vpop.f32.mrf.mxu0
    %366 = vmatprep.mubr.f32.mxu0 0.0
    %367 = vmatmul.mubr.f32.gmra.mxu0 %v161
    %v368 = vpop.f32.mrf.mxu0
    %v369 = vadd.f32 0.0, %v368
    %v370 = vpop.f32.mrf.mxu0
    %371 = vmatprep.mubr.f32.mxu0 0.0
    %372 = vmatmul.mubr.f32.gmra.mxu0 %v164
    %v373 = vpop.f32.mrf.mxu0
    %v374 = vadd.f32 0.0, %v373
    %v375 = vpop.f32.mrf.mxu0
    %376 = vmatprep.mubr.f32.mxu0 0.0
    %377 = vmatmul.mubr.f32.gmra.mxu0 %v167
    %v378 = vpop.f32.mrf.mxu0
    %v379 = vadd.f32 0.0, %v378
    %v380 = vpop.f32.mrf.mxu0
    %381 = vmatprep.mubr.f32.mxu0 0.0
    %382 = vmatmul.mubr.f32.gmra.mxu0 %v170
    %v383 = vpop.f32.mrf.mxu0
    %v384 = vadd.f32 0.0, %v383
    %v385 = vpop.f32.mrf.mxu0
    %386 = vmatprep.mubr.f32.mxu0 0.0
    %387 = vmatmul.mubr.f32.gmra.mxu0 %v173
    %v388 = vpop.f32.mrf.mxu0
    %v389 = vadd.f32 0.0, %v388
    %v390 = vpop.f32.mrf.mxu0
    %391 = vmatprep.mubr.f32.mxu0 0.0
    %392 = vmatmul.mubr.f32.gmra.mxu0 %v176
    %v393 = vpop.f32.mrf.mxu0
    %v394 = vadd.f32 0.0, %v393
    %v395 = vpop.f32.mrf.mxu0
    %396 = vmatprep.mubr.f32.mxu0 0.0
    %397 = vmatmul.mubr.f32.gmra.mxu0 %v179
    %v398 = vpop.f32.mrf.mxu0
    %v399 = vadd.f32 0.0, %v398
    %v400 = vpop.f32.mrf.mxu0
    %401 = vmatprep.mubr.f32.mxu0 0.0
    %402 = vmatmul.mubr.f32.gmra.mxu0 %v182
    %v403 = vpop.f32.mrf.mxu0
    %v404 = vadd.f32 0.0, %v403
    %v405 = vpop.f32.mrf.mxu0
    %406 = vmatprep.mubr.f32.mxu0 0.0
    %407 = vmatmul.mubr.f32.gmra.mxu0 %v185
    %v408 = vpop.f32.mrf.mxu0
    %v409 = vadd.f32 0.0, %v408
    %v410 = vpop.f32.mrf.mxu0
    %411 = vdwg.mxu0
    %v412 = vlaneseq
    %v413 = vshrl.u32 %v412, 7
    %v414 = vsub.s32 0, %v413
    %v415 = vrot.slane %v45, %v414
    %v416 = vlaneseq
    %v417 = vshrl.u32 %v416, 7
    %v418 = vsub.s32 0, %v417
    %v419 = vrot.slane %v52, %v418
    %v422 = vadd.f32 %v254, %v415
    %v423 = vadd.f32 %v259, %v415
    %v424 = vadd.f32 %v264, %v415
    %v425 = vadd.f32 %v269, %v415
    %v426 = vadd.f32 %v274, %v415
    %v427 = vadd.f32 %v279, %v415
    %v428 = vadd.f32 %v284, %v415
    %v429 = vadd.f32 %v289, %v415
    %v430 = vadd.f32 %v294, %v415
    %v431 = vadd.f32 %v299, %v415
    %v432 = vadd.f32 %v304, %v415
    %v433 = vadd.f32 %v309, %v415
    %v434 = vadd.f32 %v314, %v415
    %v435 = vadd.f32 %v319, %v415
    %v436 = vadd.f32 %v324, %v415
    %v437 = vadd.f32 %v329, %v415
    %v438 = vadd.f32 %v334, %v419
    %v439 = vadd.f32 %v339, %v419
    %v440 = vadd.f32 %v344, %v419
    %v441 = vadd.f32 %v349, %v419
    %v442 = vadd.f32 %v354, %v419
    %v443 = vadd.f32 %v359, %v419
    %v444 = vadd.f32 %v364, %v419
    %v445 = vadd.f32 %v369, %v419
    %v446 = vadd.f32 %v374, %v419
    %v447 = vadd.f32 %v379, %v419
    %v448 = vadd.f32 %v384, %v419
    %v449 = vadd.f32 %v389, %v419
    %v450 = vadd.f32 %v394, %v419
    %v451 = vadd.f32 %v399, %v419
    %v452 = vadd.f32 %v404, %v419
    %v453 = vadd.f32 %v409, %v419
    %v454 = vmax.f32 %v422, 0.0
    %v455 = vmax.f32 %v423, 0.0
    %v456 = vmax.f32 %v424, 0.0
    %v457 = vmax.f32 %v425, 0.0
    %v458 = vmax.f32 %v426, 0.0
    %v459 = vmax.f32 %v427, 0.0
    %v460 = vmax.f32 %v428, 0.0
    %v461 = vmax.f32 %v429, 0.0
    %v462 = vmax.f32 %v430, 0.0
    %v463 = vmax.f32 %v431, 0.0
    %v464 = vmax.f32 %v432, 0.0
    %v465 = vmax.f32 %v433, 0.0
    %v466 = vmax.f32 %v434, 0.0
    %v467 = vmax.f32 %v435, 0.0
    %v468 = vmax.f32 %v436, 0.0
    %v469 = vmax.f32 %v437, 0.0
    %v470 = vmax.f32 %v438, 0.0
    %v471 = vmax.f32 %v439, 0.0
    %v472 = vmax.f32 %v440, 0.0
    %v473 = vmax.f32 %v441, 0.0
    %v474 = vmax.f32 %v442, 0.0
    %v475 = vmax.f32 %v443, 0.0
    %v476 = vmax.f32 %v444, 0.0
    %v477 = vmax.f32 %v445, 0.0
    %v478 = vmax.f32 %v446, 0.0
    %v479 = vmax.f32 %v447, 0.0
    %v480 = vmax.f32 %v448, 0.0
    %v481 = vmax.f32 %v449, 0.0
    %v482 = vmax.f32 %v450, 0.0
    %v483 = vmax.f32 %v451, 0.0
    %v484 = vmax.f32 %v452, 0.0
    %v485 = vmax.f32 %v453, 0.0
    %v487 = vlaneseq
    %v488 = vshrl.u32 %v487, 7
    %v489 = vsub.s32 0, %v488
    %v490 = vrot.slane %v53, %v489
    %v492 = vmul.f32 %v454, %v490
    %v493 = vmul.f32 %v455, %v490
    %v494 = vmul.f32 %v456, %v490
    %v495 = vmul.f32 %v457, %v490
    %v496 = vmul.f32 %v458, %v490
    %v497 = vmul.f32 %v459, %v490
    %v498 = vmul.f32 %v460, %v490
    %v499 = vmul.f32 %v461, %v490
    %v500 = vmul.f32 %v462, %v490
    %v501 = vmul.f32 %v463, %v490
    %v502 = vmul.f32 %v464, %v490
    %v503 = vmul.f32 %v465, %v490
    %v504 = vmul.f32 %v466, %v490
    %v505 = vmul.f32 %v467, %v490
    %v506 = vmul.f32 %v468, %v490
    %v507 = vmul.f32 %v469, %v490
    %v508 = vmul.f32 %v470, %v490
    %v509 = vmul.f32 %v471, %v490
    %v510 = vmul.f32 %v472, %v490
    %v511 = vmul.f32 %v473, %v490
    %v512 = vmul.f32 %v474, %v490
    %v513 = vmul.f32 %v475, %v490
    %v514 = vmul.f32 %v476, %v490
    %v515 = vmul.f32 %v477, %v490
    %v516 = vmul.f32 %v478, %v490
    %v517 = vmul.f32 %v479, %v490
    %v518 = vmul.f32 %v480, %v490
    %v519 = vmul.f32 %v481, %v490
    %v520 = vmul.f32 %v482, %v490
    %v521 = vmul.f32 %v483, %v490
    %v522 = vmul.f32 %v484, %v490
    %v523 = vmul.f32 %v485, %v490
    %v524 = vsel %vm90, %v492, 0.0
    %525 = vadd.xlane.f32.xlu0 %v524
    %v526 = vpop.xlane.xlu0 %525
    %v527 = vsel %vm90, %v493, 0.0
    %528 = vadd.xlane.f32.xlu0 %v527
    %v529 = vpop.xlane.xlu0 %528
    %v530 = vsel %vm90, %v494, 0.0
    %531 = vadd.xlane.f32.xlu0 %v530
    %v532 = vpop.xlane.xlu0 %531
    %v533 = vsel %vm90, %v495, 0.0
    %534 = vadd.xlane.f32.xlu0 %v533
    %v535 = vpop.xlane.xlu0 %534
    %v536 = vsel %vm90, %v496, 0.0
    %537 = vadd.xlane.f32.xlu0 %v536
    %v538 = vpop.xlane.xlu0 %537
    %v539 = vsel %vm90, %v497, 0.0
    %540 = vadd.xlane.f32.xlu0 %v539
    %v541 = vpop.xlane.xlu0 %540
    %v542 = vsel %vm90, %v498, 0.0
    %543 = vadd.xlane.f32.xlu0 %v542
    %v544 = vpop.xlane.xlu0 %543
    %v545 = vsel %vm90, %v499, 0.0
    %546 = vadd.xlane.f32.xlu0 %v545
    %v547 = vpop.xlane.xlu0 %546
    %v548 = vsel %vm90, %v500, 0.0
    %549 = vadd.xlane.f32.xlu0 %v548
    %v550 = vpop.xlane.xlu0 %549
    %v551 = vsel %vm90, %v501, 0.0
    %552 = vadd.xlane.f32.xlu0 %v551
    %v553 = vpop.xlane.xlu0 %552
    %v554 = vsel %vm90, %v502, 0.0
    %555 = vadd.xlane.f32.xlu0 %v554
    %v556 = vpop.xlane.xlu0 %555
    %v557 = vsel %vm90, %v503, 0.0
    %558 = vadd.xlane.f32.xlu0 %v557
    %v559 = vpop.xlane.xlu0 %558
    %v560 = vsel %vm90, %v504, 0.0
    %561 = vadd.xlane.f32.xlu0 %v560
    %v562 = vpop.xlane.xlu0 %561
    %v563 = vsel %vm90, %v505, 0.0
    %564 = vadd.xlane.f32.xlu0 %v563
    %v565 = vpop.xlane.xlu0 %564
    %v566 = vsel %vm90, %v506, 0.0
    %567 = vadd.xlane.f32.xlu0 %v566
    %v568 = vpop.xlane.xlu0 %567
    %v569 = vsel %vm90, %v507, 0.0
    %570 = vadd.xlane.f32.xlu0 %v569
    %v571 = vpop.xlane.xlu0 %570
    %v572 = vsel %vm90, %v508, 0.0
    %573 = vadd.xlane.f32.xlu0 %v572
    %v574 = vpop.xlane.xlu0 %573
    %v575 = vsel %vm90, %v509, 0.0
    %576 = vadd.xlane.f32.xlu0 %v575
    %v577 = vpop.xlane.xlu0 %576
    %v578 = vsel %vm90, %v510, 0.0
    %579 = vadd.xlane.f32.xlu0 %v578
    %v580 = vpop.xlane.xlu0 %579
    %v581 = vsel %vm90, %v511, 0.0
    %582 = vadd.xlane.f32.xlu0 %v581
    %v583 = vpop.xlane.xlu0 %582
    %v584 = vsel %vm90, %v512, 0.0
    %585 = vadd.xlane.f32.xlu0 %v584
    %v586 = vpop.xlane.xlu0 %585
    %v587 = vsel %vm90, %v513, 0.0
    %588 = vadd.xlane.f32.xlu0 %v587
    %v589 = vpop.xlane.xlu0 %588
    %v590 = vsel %vm90, %v514, 0.0
    %591 = vadd.xlane.f32.xlu0 %v590
    %v592 = vpop.xlane.xlu0 %591
    %v593 = vsel %vm90, %v515, 0.0
    %594 = vadd.xlane.f32.xlu0 %v593
    %v595 = vpop.xlane.xlu0 %594
    %v596 = vsel %vm90, %v516, 0.0
    %597 = vadd.xlane.f32.xlu0 %v596
    %v598 = vpop.xlane.xlu0 %597
    %v599 = vsel %vm90, %v517, 0.0
    %600 = vadd.xlane.f32.xlu0 %v599
    %v601 = vpop.xlane.xlu0 %600
    %v602 = vsel %vm90, %v518, 0.0
    %603 = vadd.xlane.f32.xlu0 %v602
    %v604 = vpop.xlane.xlu0 %603
    %v605 = vsel %vm90, %v519, 0.0
    %606 = vadd.xlane.f32.xlu0 %v605
    %v607 = vpop.xlane.xlu0 %606
    %v608 = vsel %vm90, %v520, 0.0
    %609 = vadd.xlane.f32.xlu0 %v608
    %v610 = vpop.xlane.xlu0 %609
    %v611 = vsel %vm90, %v521, 0.0
    %612 = vadd.xlane.f32.xlu0 %v611
    %v613 = vpop.xlane.xlu0 %612
    %v614 = vsel %vm90, %v522, 0.0
    %615 = vadd.xlane.f32.xlu0 %v614
    %v616 = vpop.xlane.xlu0 %615
    %v617 = vsel %vm90, %v523, 0.0
    %618 = vadd.xlane.f32.xlu0 %v617
    %v619 = vpop.xlane.xlu0 %618
    %s620 = smul.u32 0, 128
    %s621 = sadd.s32 %s620, 0
    %v622 = vlaneseq
    %v623 = vand.u32 %v622, 127
    %v624 = vstv %s621
    %v625 = vadd.s32 %v624, %v623
    %vm626 = vcmp.lt.s32.totalorder %v625, 8
    %v659 = vlaneseq
    %v660 = vshrl.u32 %v659, 7
    %v661 = vsub.s32 %v623, %v660
    %v662 = vrot.slane %v526, %v661
    %v663 = vadd.s32 %v623, 4294967288
    %v664 = vlaneseq
    %v665 = vshrl.u32 %v664, 7
    %v666 = vsub.s32 %v663, %v665
    %v667 = vrot.slane %v529, %v666
    %vm668 = vcmask 130112
    %v669 = vsel %vm668, %v667, %v662
    %v670 = vadd.s32 %v623, 4294967280
    %v671 = vlaneseq
    %v672 = vshrl.u32 %v671, 7
    %v673 = vsub.s32 %v670, %v672
    %v674 = vrot.slane %v532, %v673
    %vm675 = vcmask 195712
    %v676 = vsel %vm675, %v674, %v669
    %v677 = vadd.s32 %v623, 4294967272
    %v678 = vlaneseq
    %v679 = vshrl.u32 %v678, 7
    %v680 = vsub.s32 %v677, %v679
    %v681 = vrot.slane %v535, %v680
    %vm682 = vcmask 261312
    %v683 = vsel %vm682, %v681, %v676
    %v684 = vadd.s32 %v623, 4294967264
    %v685 = vlaneseq
    %v686 = vshrl.u32 %v685, 7
    %v687 = vsub.s32 %v684, %v686
    %v688 = vrot.slane %v538, %v687
    %vm689 = vcmask 326912
    %v690 = vsel %vm689, %v688, %v683
    %v691 = vadd.s32 %v623, 4294967256
    %v692 = vlaneseq
    %v693 = vshrl.u32 %v692, 7
    %v694 = vsub.s32 %v691, %v693
    %v695 = vrot.slane %v541, %v694
    %vm696 = vcmask 392512
    %v697 = vsel %vm696, %v695, %v690
    %v698 = vadd.s32 %v623, 4294967248
    %v699 = vlaneseq
    %v700 = vshrl.u32 %v699, 7
    %v701 = vsub.s32 %v698, %v700
    %v702 = vrot.slane %v544, %v701
    %vm703 = vcmask 458112
    %v704 = vsel %vm703, %v702, %v697
    %v705 = vadd.s32 %v623, 4294967240
    %v706 = vlaneseq
    %v707 = vshrl.u32 %v706, 7
    %v708 = vsub.s32 %v705, %v707
    %v709 = vrot.slane %v547, %v708
    %vm710 = vcmask 523712
    %v711 = vsel %vm710, %v709, %v704
    %v712 = vadd.s32 %v623, 4294967232
    %v713 = vlaneseq
    %v714 = vshrl.u32 %v713, 7
    %v715 = vsub.s32 %v712, %v714
    %v716 = vrot.slane %v550, %v715
    %vm717 = vcmask 589312
    %v718 = vsel %vm717, %v716, %v711
    %v719 = vadd.s32 %v623, 4294967224
    %v720 = vlaneseq
    %v721 = vshrl.u32 %v720, 7
    %v722 = vsub.s32 %v719, %v721
    %v723 = vrot.slane %v553, %v722
    %vm724 = vcmask 654912
    %v725 = vsel %vm724, %v723, %v718
    %v726 = vadd.s32 %v623, 4294967216
    %v727 = vlaneseq
    %v728 = vshrl.u32 %v727, 7
    %v729 = vsub.s32 %v726, %v728
    %v730 = vrot.slane %v556, %v729
    %vm731 = vcmask 720512
    %v732 = vsel %vm731, %v730, %v725
    %v733 = vadd.s32 %v623, 4294967208
    %v734 = vlaneseq
    %v735 = vshrl.u32 %v734, 7
    %v736 = vsub.s32 %v733, %v735
    %v737 = vrot.slane %v559, %v736
    %vm738 = vcmask 786112
    %v739 = vsel %vm738, %v737, %v732
    %v740 = vadd.s32 %v623, 4294967200
    %v741 = vlaneseq
    %v742 = vshrl.u32 %v741, 7
    %v743 = vsub.s32 %v740, %v742
    %v744 = vrot.slane %v562, %v743
    %vm745 = vcmask 851712
    %v746 = vsel %vm745, %v744, %v739
    %v747 = vadd.s32 %v623, 4294967192
    %v748 = vlaneseq
    %v749 = vshrl.u32 %v748, 7
    %v750 = vsub.s32 %v747, %v749
    %v751 = vrot.slane %v565, %v750
    %vm752 = vcmask 917312
    %v753 = vsel %vm752, %v751, %v746
    %v754 = vadd.s32 %v623, 4294967184
    %v755 = vlaneseq
    %v756 = vshrl.u32 %v755, 7
    %v757 = vsub.s32 %v754, %v756
    %v758 = vrot.slane %v568, %v757
    %vm759 = vcmask 982912
    %v760 = vsel %vm759, %v758, %v753
    %v761 = vadd.s32 %v623, 4294967176
    %v762 = vlaneseq
    %v763 = vshrl.u32 %v762, 7
    %v764 = vsub.s32 %v761, %v763
    %v765 = vrot.slane %v571, %v764
    %vm766 = vcmask 1048512
    %v767 = vsel %vm766, %v765, %v760
    %v768 = vlaneseq
    %v769 = vshrl.u32 %v768, 7
    %v770 = vsub.s32 %v623, %v769
    %v771 = vrot.slane %v574, %v770
    %v772 = vlaneseq
    %v773 = vshrl.u32 %v772, 7
    %v774 = vsub.s32 %v663, %v773
    %v775 = vrot.slane %v577, %v774
    %v776 = vsel %vm668, %v775, %v771
    %v777 = vlaneseq
    %v778 = vshrl.u32 %v777, 7
    %v779 = vsub.s32 %v670, %v778
    %v780 = vrot.slane %v580, %v779
    %v781 = vsel %vm675, %v780, %v776
    %v782 = vlaneseq
    %v783 = vshrl.u32 %v782, 7
    %v784 = vsub.s32 %v677, %v783
    %v785 = vrot.slane %v583, %v784
    %v786 = vsel %vm682, %v785, %v781
    %v787 = vlaneseq
    %v788 = vshrl.u32 %v787, 7
    %v789 = vsub.s32 %v684, %v788
    %v790 = vrot.slane %v586, %v789
    %v791 = vsel %vm689, %v790, %v786
    %v792 = vlaneseq
    %v793 = vshrl.u32 %v792, 7
    %v794 = vsub.s32 %v691, %v793
    %v795 = vrot.slane %v589, %v794
    %v796 = vsel %vm696, %v795, %v791
    %v797 = vlaneseq
    %v798 = vshrl.u32 %v797, 7
    %v799 = vsub.s32 %v698, %v798
    %v800 = vrot.slane %v592, %v799
    %v801 = vsel %vm703, %v800, %v796
    %v802 = vlaneseq
    %v803 = vshrl.u32 %v802, 7
    %v804 = vsub.s32 %v705, %v803
    %v805 = vrot.slane %v595, %v804
    %v806 = vsel %vm710, %v805, %v801
    %v807 = vlaneseq
    %v808 = vshrl.u32 %v807, 7
    %v809 = vsub.s32 %v712, %v808
    %v810 = vrot.slane %v598, %v809
    %v811 = vsel %vm717, %v810, %v806
    %v812 = vlaneseq
    %v813 = vshrl.u32 %v812, 7
    %v814 = vsub.s32 %v719, %v813
    %v815 = vrot.slane %v601, %v814
    %v816 = vsel %vm724, %v815, %v811
    %v817 = vlaneseq
    %v818 = vshrl.u32 %v817, 7
    %v819 = vsub.s32 %v726, %v818
    %v820 = vrot.slane %v604, %v819
    %v821 = vsel %vm731, %v820, %v816
    %v822 = vlaneseq
    %v823 = vshrl.u32 %v822, 7
    %v824 = vsub.s32 %v733, %v823
    %v825 = vrot.slane %v607, %v824
    %v826 = vsel %vm738, %v825, %v821
    %v827 = vlaneseq
    %v828 = vshrl.u32 %v827, 7
    %v829 = vsub.s32 %v740, %v828
    %v830 = vrot.slane %v610, %v829
    %v831 = vsel %vm745, %v830, %v826
    %v832 = vlaneseq
    %v833 = vshrl.u32 %v832, 7
    %v834 = vsub.s32 %v747, %v833
    %v835 = vrot.slane %v613, %v834
    %v836 = vsel %vm752, %v835, %v831
    %v837 = vlaneseq
    %v838 = vshrl.u32 %v837, 7
    %v839 = vsub.s32 %v754, %v838
    %v840 = vrot.slane %v616, %v839
    %v841 = vsel %vm759, %v840, %v836
    %v842 = vlaneseq
    %v843 = vshrl.u32 %v842, 7
    %v844 = vsub.s32 %v761, %v843
    %v845 = vrot.slane %v619, %v844
    %v846 = vsel %vm766, %v845, %v841
    %vm847 = vcmask 1041409
    %v848 = vsel %vm847, %v846, %v767
    %v850 = vsel %vm626, %v848, -1e+30
    %s851 = sshra.s32 %s621, 7
    %s852 = sand.u32 %s621, 127
    %s853 = scalar_lea.vmem [#allocation6], %s851
    %854 = vst [vmem:[%s853] sm:$0x3] %v850
    %s855 = sshra.s32 %s620, 7
    %s856 = sand.u32 %s620, 127
    %s857 = scalar_lea.vmem [#allocation6], %s855
    %v858 = vld [vmem:[%s857] sm:$0x3]
    %v859 = vld [vmem:[#allocation2] sm:$0x3]
    %vm860 = vcmask 1041408
    %v861 = vsel %vm860, %v858, -inf
    %862 = vmax.xlane.f32.xlu0 %v861
    %v863 = vpop.xlane.xlu0 %862
    %v864 = vmax.f32 %v859, %v863
    %v865 = vsub.f32 %v859, %v864
    %v866 = vmul.f32 %v865, 1.442695
    %v867 = vpow.pop %v866
    %869 = vset.pattern.permute.xlu0 0
    %870 = vperm.xlu0 %869, %v864
    %v871 = vpop.permute.xlu0 %870
    %v873 = vsub.f32 %v858, %v871
    %v874 = vmul.f32 %v873, 1.442695
    %v875 = vpow.pop %v874
    %v878 = vunpack.c.l.s4 1966171168
    %v879 = vunpack.c.0.s8 %v878
    %v880 = vlaneseq
    %v881 = vshrl.u32 %v880, 7
    %v882 = vsub.s32 %v879, %v881
    %v883 = vrot.slane %v875, %v882
    %v884 = vcombine.high %v883, %v883
    %v886 = vunpack.c.l.s4 1966171168
    %v887 = vunpack.c.0.s8 %v886
    %v888 = vlaneseq
    %v889 = vshrl.u32 %v888, 7
    %v890 = vsub.s32 %v887, %v889
    %v891 = vrot.slane %v883, %v890
    %v893 = vunpack.c.l.s4 1966171168
    %v894 = vunpack.c.0.s8 %v893
    %v895 = vlaneseq
    %v896 = vshrl.u32 %v895, 7
    %v897 = vsub.s32 %v894, %v896
    %v898 = vrot.slane %v884, %v897
    %v901 = vld [vmem:[%s0] sm:$0xff]
    %v902 = vld [vmem:[%s0 + $0x8] sm:$0xff]
    %v903 = vld [vmem:[%s0 + $0x10] sm:$0xff]
    %v904 = vld [vmem:[%s0 + $0x18] sm:$0xff]
    %v905 = vld [vmem:[%s0 + $0x20] sm:$0xff]
    %v906 = vld [vmem:[%s0 + $0x28] sm:$0xff]
    %v907 = vld [vmem:[%s0 + $0x30] sm:$0xff]
    %v908 = vld [vmem:[%s0 + $0x38] sm:$0xff]
    %v909 = vld [vmem:[%s0 + $0x40] sm:$0xff]
    %v910 = vld [vmem:[%s0 + $0x48] sm:$0xff]
    %v911 = vld [vmem:[%s0 + $0x50] sm:$0xff]
    %v912 = vld [vmem:[%s0 + $0x58] sm:$0xff]
    %v913 = vld [vmem:[%s0 + $0x60] sm:$0xff]
    %v914 = vld [vmem:[%s0 + $0x68] sm:$0xff]
    %v915 = vld [vmem:[%s0 + $0x70] sm:$0xff]
    %v916 = vld [vmem:[%s0 + $0x78] sm:$0xff]
    %v917 = vld [vmem:[%s0 + $0x80] sm:$0xff]
    %v918 = vld [vmem:[%s0 + $0x88] sm:$0xff]
    %v919 = vld [vmem:[%s0 + $0x90] sm:$0xff]
    %v920 = vld [vmem:[%s0 + $0x98] sm:$0xff]
    %v921 = vld [vmem:[%s0 + $0xa0] sm:$0xff]
    %v922 = vld [vmem:[%s0 + $0xa8] sm:$0xff]
    %v923 = vld [vmem:[%s0 + $0xb0] sm:$0xff]
    %v924 = vld [vmem:[%s0 + $0xb8] sm:$0xff]
    %v925 = vld [vmem:[%s0 + $0xc0] sm:$0xff]
    %v926 = vld [vmem:[%s0 + $0xc8] sm:$0xff]
    %v927 = vld [vmem:[%s0 + $0xd0] sm:$0xff]
    %v928 = vld [vmem:[%s0 + $0xd8] sm:$0xff]
    %v929 = vld [vmem:[%s0 + $0xe0] sm:$0xff]
    %v930 = vld [vmem:[%s0 + $0xe8] sm:$0xff]
    %v931 = vld [vmem:[%s0 + $0xf0] sm:$0xff]
    %v932 = vld [vmem:[%s0 + $0xf8] sm:$0xff]
    %933 = vmatprep.subr.mxu0 0.0
    %934 = vmatpush1.msra.mxu0 %v916
    %935 = vmatprep.subr.mxu0 0.0
    %936 = vmatpush1.msra.mxu0 %v915
    %937 = vmatprep.subr.mxu0 0.0
    %938 = vmatpush1.msra.mxu0 %v914
    %939 = vmatprep.subr.mxu0 0.0
    %940 = vmatpush1.msra.mxu0 %v913
    %941 = vmatprep.subr.mxu0 0.0
    %942 = vmatpush1.msra.mxu0 %v912
    %943 = vmatprep.subr.mxu0 0.0
    %944 = vmatpush1.msra.mxu0 %v911
    %945 = vmatprep.subr.mxu0 0.0
    %946 = vmatpush1.msra.mxu0 %v910
    %947 = vmatprep.subr.mxu0 0.0
    %948 = vmatpush1.msra.mxu0 %v909
    %949 = vmatprep.subr.mxu0 0.0
    %950 = vmatpush1.msra.mxu0 %v908
    %951 = vmatprep.subr.mxu0 0.0
    %952 = vmatpush1.msra.mxu0 %v907
    %953 = vmatprep.subr.mxu0 0.0
    %954 = vmatpush1.msra.mxu0 %v906
    %955 = vmatprep.subr.mxu0 0.0
    %956 = vmatpush1.msra.mxu0 %v905
    %957 = vmatprep.subr.mxu0 0.0
    %958 = vmatpush1.msra.mxu0 %v904
    %959 = vmatprep.subr.mxu0 0.0
    %960 = vmatpush1.msra.mxu0 %v903
    %961 = vmatprep.subr.mxu0 0.0
    %962 = vmatpush1.msra.mxu0 %v902
    %963 = vmatprep.subr.mxu0 0.0
    %964 = vmatpush1.msra.mxu0 %v901
    %965 = vmatprep.subr.mxu0 0.0
    %966 = vmatpush2.msra.mxu0 0.0
    %967 = vmatprep.subr.mxu0 0.0
    %968 = vmatpush2.msra.mxu0 0.0
    %969 = vmatprep.subr.mxu0 0.0
    %970 = vmatpush2.msra.mxu0 0.0
    %971 = vmatprep.subr.mxu0 0.0
    %972 = vmatpush2.msra.mxu0 0.0
    %973 = vmatprep.subr.mxu0 0.0
    %974 = vmatpush2.msra.mxu0 0.0
    %975 = vmatprep.subr.mxu0 0.0
    %976 = vmatpush2.msra.mxu0 0.0
    %977 = vmatprep.subr.mxu0 0.0
    %978 = vmatpush2.msra.mxu0 0.0
    %979 = vmatprep.subr.mxu0 0.0
    %980 = vmatpush2.msra.mxu0 0.0
    %981 = vmatprep.subr.mxu0 0.0
    %982 = vmatpush2.msra.mxu0 0.0
    %983 = vmatprep.subr.mxu0 0.0
    %984 = vmatpush2.msra.mxu0 0.0
    %985 = vmatprep.subr.mxu0 0.0
    %986 = vmatpush2.msra.mxu0 0.0
    %987 = vmatprep.subr.mxu0 0.0
    %988 = vmatpush2.msra.mxu0 0.0
    %989 = vmatprep.subr.mxu0 0.0
    %990 = vmatpush2.msra.mxu0 0.0
    %991 = vmatprep.subr.mxu0 0.0
    %992 = vmatpush2.msra.mxu0 0.0
    %993 = vmatprep.subr.mxu0 0.0
    %994 = vmatpush2.msra.mxu0 0.0
    %995 = vmatprep.subr.mxu0 0.0
    %996 = vmatpush2.msra.mxu0 0.0
    %997 = vmatprep.mubr.f32.mxu0 0.0
    %998 = vmatmul.mubr.f32.gmra.mxu0 %v891
    %v999 = vpop.f32.mrf.mxu0
    %v1000 = vadd.f32 0.0, %v999
    %v1001 = vpop.f32.mrf.mxu0
    %1002 = vdwg.mxu0
    %1003 = vmatprep.subr.mxu0 0.0
    %1004 = vmatpush1.msra.mxu0 %v932
    %1005 = vmatprep.subr.mxu0 0.0
    %1006 = vmatpush1.msra.mxu0 %v931
    %1007 = vmatprep.subr.mxu0 0.0
    %1008 = vmatpush1.msra.mxu0 %v930
    %1009 = vmatprep.subr.mxu0 0.0
    %1010 = vmatpush1.msra.mxu0 %v929
    %1011 = vmatprep.subr.mxu0 0.0
    %1012 = vmatpush1.msra.mxu0 %v928
    %1013 = vmatprep.subr.mxu0 0.0
    %1014 = vmatpush1.msra.mxu0 %v927
    %1015 = vmatprep.subr.mxu0 0.0
    %1016 = vmatpush1.msra.mxu0 %v926
    %1017 = vmatprep.subr.mxu0 0.0
    %1018 = vmatpush1.msra.mxu0 %v925
    %1019 = vmatprep.subr.mxu0 0.0
    %1020 = vmatpush1.msra.mxu0 %v924
    %1021 = vmatprep.subr.mxu0 0.0
    %1022 = vmatpush1.msra.mxu0 %v923
    %1023 = vmatprep.subr.mxu0 0.0
    %1024 = vmatpush1.msra.mxu0 %v922
    %1025 = vmatprep.subr.mxu0 0.0
    %1026 = vmatpush1.msra.mxu0 %v921
    %1027 = vmatprep.subr.mxu0 0.0
    %1028 = vmatpush1.msra.mxu0 %v920
    %1029 = vmatprep.subr.mxu0 0.0
    %1030 = vmatpush1.msra.mxu0 %v919
    %1031 = vmatprep.subr.mxu0 0.0
    %1032 = vmatpush1.msra.mxu0 %v918
    %1033 = vmatprep.subr.mxu0 0.0
    %1034 = vmatpush1.msra.mxu0 %v917
    %1035 = vmatprep.subr.mxu0 0.0
    %1036 = vmatpush2.msra.mxu0 0.0
    %1037 = vmatprep.subr.mxu0 0.0
    %1038 = vmatpush2.msra.mxu0 0.0
    %1039 = vmatprep.subr.mxu0 0.0
    %1040 = vmatpush2.msra.mxu0 0.0
    %1041 = vmatprep.subr.mxu0 0.0
    %1042 = vmatpush2.msra.mxu0 0.0
    %1043 = vmatprep.subr.mxu0 0.0
    %1044 = vmatpush2.msra.mxu0 0.0
    %1045 = vmatprep.subr.mxu0 0.0
    %1046 = vmatpush2.msra.mxu0 0.0
    %1047 = vmatprep.subr.mxu0 0.0
    %1048 = vmatpush2.msra.mxu0 0.0
    %1049 = vmatprep.subr.mxu0 0.0
    %1050 = vmatpush2.msra.mxu0 0.0
    %1051 = vmatprep.subr.mxu0 0.0
    %1052 = vmatpush2.msra.mxu0 0.0
    %1053 = vmatprep.subr.mxu0 0.0
    %1054 = vmatpush2.msra.mxu0 0.0
    %1055 = vmatprep.subr.mxu0 0.0
    %1056 = vmatpush2.msra.mxu0 0.0
    %1057 = vmatprep.subr.mxu0 0.0
    %1058 = vmatpush2.msra.mxu0 0.0
    %1059 = vmatprep.subr.mxu0 0.0
    %1060 = vmatpush2.msra.mxu0 0.0
    %1061 = vmatprep.subr.mxu0 0.0
    %1062 = vmatpush2.msra.mxu0 0.0
    %1063 = vmatprep.subr.mxu0 0.0
    %1064 = vmatpush2.msra.mxu0 0.0
    %1065 = vmatprep.subr.mxu0 0.0
    %1066 = vmatpush2.msra.mxu0 0.0
    %1067 = vmatprep.mubr.f32.mxu0 0.0
    %1068 = vmatmul.mubr.f32.gmra.mxu0 %v898
    %v1069 = vpop.f32.mrf.mxu0
    %v1070 = vadd.f32 0.0, %v1069
    %v1071 = vpop.f32.mrf.mxu0
    %1072 = vdwg.mxu0
    %v1073 = vld [vmem:[#allocation3] sm:$0x3]
    %1075 = vset.pattern.permute.xlu0 0
    %1076 = vperm.xlu0 %1075, %v867
    %v1077 = vpop.permute.xlu0 %1076
    %v1079 = vmul.f32 %v1077, %v1073
    %v1082 = vrot.slane %v1070, 7
    %v1083 = vsel %vm847, %v1082, %v1000
    %v1085 = vadd.f32 %v1079, %v1083
    %vm1086 = vcmask 254976
    %1087 = vst.msk [vmem:[#allocation3] sm:$0x3] %vm1086, %v1085
    %vm1088 = vcmask 1024
    %1089 = vst.msk [vmem:[#allocation2] sm:$0x3] %vm1088, %v864
    // Predicated region
    $region22: #{x3_self_attention.1} parent=1 // pred_check
      %p1090 = pneg %p21
    $region23: #{x3_self_attention.1} parent=1 // pred_check_branch
      %1092 = sbr.rel (%p1090) target = $region25
    $region24: #{x3_self_attention.1} parent=1 // pred_region
      %v1093 = vld [vmem:[#allocation6] sm:$0x3]
      %v1094 = vld [vmem:[#allocation2] sm:$0x3]
      %1096 = vset.pattern.permute.xlu0 0
      %1097 = vperm.xlu0 %1096, %v1094
      %v1098 = vpop.permute.xlu0 %1097
      %v1100 = vsub.f32 %v1093, %v1098
      %v1101 = vmul.f32 %v1100, 1.442695
      %v1102 = vpow.pop %v1101
      %v1103 = vsel %vm860, %v1102, 0.0
      %1104 = vadd.xlane.f32.xlu0 %v1103
      %v1105 = vpop.xlane.xlu0 %1104
      %v1106 = vrcp.pop %v1105
      %v1107 = vmul.f32 %v1102, %v1106
      %1108 = vst [vmem:[#allocation6] sm:$0x3] %v1107
      %v1109 = vld [vmem:[#allocation3] sm:$0x3]
      %v1110 = vmul.f32 %v1109, %v1106
      %1111 = vst.msk [vmem:[#allocation4] sm:$0x3] %vm1086, %v1110
    $region25: #{x3_self_attention.1} parent=1 // pred_fallthru
      _
    // Predicated region
    $region26: #{x3_self_attention.1} parent=1 // pred_check
      _
    $region27: #{x3_self_attention.1} parent=1 // pred_check_branch
      %1113 = sbr.rel (0) target = $region29
    $region28: #{x3_self_attention.1} parent=1 // pred_region
      %s1115 = ssub.s32 32, 32
      %1116 = vsyncadd [#allocation5], %s1115
      %s1118 = sshll.u32 [#allocation4], 4
      %s1119 = int_to_ptr.vmem [resolvable:$true] %s1118
      %1121 = dma.vmem_to_hbm [thread:$0]  %s1119, 32, %s4, [#allocation5]
    $region29: #{x3_self_attention.1} parent=1 // pred_fallthru
      _
    // Predicated region
    $region30: #{x3_self_attention.1} parent=1 // pred_check
      _
    $region31: #{x3_self_attention.1} parent=1 // pred_check_branch
      %1123 = sbr.rel (0) target = $region33
    $region32: #{x3_self_attention.1} parent=1 // pred_region
      %s1125 = ssub.s32 32, 32
      %1126 = vsyncadd [#allocation7], %s1125
      %s1128 = sshll.u32 [#allocation6], 4
      %s1129 = int_to_ptr.vmem [resolvable:$true] %s1128
      %1131 = dma.vmem_to_hbm [thread:$0]  %s1129, 32, %s5, [#allocation7]
    $region33: #{x3_self_attention.1} parent=1 // pred_fallthru
      _
    // Predicated region
    $region34: #{x3_self_attention.1} parent=1 // pred_check
      _
    $region35: #{x3_self_attention.1} parent=1 // pred_check_branch
      %1133 = sbr.rel (0) target = $region37
    $region36: #{x3_self_attention.1} parent=1 // pred_region
      %1134 = dma.done [#allocation5], 32
    $region37: #{x3_self_attention.1} parent=1 // pred_fallthru
      _
    // Predicated region
    $region38: #{x3_self_attention.1} parent=1 // pred_check
      _
    $region39: #{x3_self_attention.1} parent=1 // pred_check_branch
      %1136 = sbr.rel (0) target = $region41
    $region40: #{x3_self_attention.1} parent=1 // pred_region
      %1137 = dma.done [#allocation7], 32
    $region41: #{x3_self_attention.1} parent=1 // pred_fallthru
      _
    %1138 = vsyncpa [#allocation5], 1
    %1139 = vsyncpa [#allocation7], 1

</llo_original>
